<compile_context>
chip_gen: v5e
topology: v5e:2x2
jax: 0.10.0
libtpu: 0.0.40
codegen_flags: <defaults>
</compile_context>

<pallas_src>
import functools

import jax
import jax.numpy as jnp
from jax.experimental import pallas as pl
from jax.experimental.pallas import tpu as pltpu


def _round_up(x, m):
    return ((x + m - 1) // m) * m


def _graphconv_kernel(x_ref, w_ref, b_ref, o_ref):
    # x_ref: (tile_m, (K+1)*F)  fused self+neighbor features   (bf16)
    # w_ref: ((K+1)*F, out)     full Linear weight (resident)   (bf16)
    # b_ref: (1, out)           bias (resident)                 (f32)
    # o_ref: (tile_m, out)      output tile
    acc = jnp.dot(x_ref[...], w_ref[...], preferred_element_type=jnp.float32)
    o_ref[...] = (acc + b_ref[...]).astype(o_ref.dtype)


@functools.partial(jax.jit, static_argnames=("tile_m", "compute_dtype"))
def graph_conv_forward(inputs, neighbors_index, weight, bias, *,
                       tile_m=512, compute_dtype=jnp.bfloat16):
    """Pallas implementation of GraphConv.forward.

    inputs:          (B, N, F) float32
    neighbors_index: (B, N, K) int32, global indices into the flattened (B*N) axis
    weight:          ((K+1)*F, out) float32   (== torch Linear.weight.T)
    bias:            (out,)    float32
    returns:         (B, N, out) with inputs.dtype
    """
    B, N, F = inputs.shape
    K = neighbors_index.shape[-1]
    out_features = weight.shape[1]
    assert weight.shape[0] == (K + 1) * F, "Linear expects (K+1)*F input features"

    M = B * N
    K1F = (K + 1) * F
    out_dtype = inputs.dtype
    cd_bytes = jnp.dtype(compute_dtype).itemsize
    out_bytes = jnp.dtype(out_dtype).itemsize

    # --- tile_m selection -------------------------------------------------
    # (a) keep grid_m >= 2 so the "parallel" node axis shards across both
    #     TensorCores on v7x (no effect on v5e/v6e which have 1 TC/chip),
    tile_m = min(tile_m, max(16, _round_up(pl.cdiv(M, 2), 16)))
    tile_m = max(16, _round_up(tile_m, 16))
    # (b) fit the per-tile working set into a trace-time VMEM budget
    #     (v7x: 64 MiB/core, v5e/v6e: 128 MiB) with headroom.
    try:
        vmem_cap = int(pltpu.get_tpu_info().vmem_capacity_bytes)
    except Exception:
        vmem_cap = 64 * 1024 * 1024  # conservative fallback (v7x per-core)
    vmem_budget = int(min(vmem_cap * 3 // 4, 96 * 1024 * 1024))
    resident = K1F * out_features * cd_bytes + out_features * 4  # single-buffered
    per_row = 2 * K1F * cd_bytes + 2 * out_features * out_bytes  # double-buffered streams
    max_rows = max(16, ((vmem_budget - resident) // max(per_row, 1)) // 16 * 16)
    tile_m = max(16, min(tile_m, max_rows))

    grid_m = pl.cdiv(M, tile_m)

    # --- glue (XLA): fused self+neighbor gather, dtype casts ----------------
    # TODO(synk): the per-row neighbor gather stays in XLA -- arbitrary per-row
    # indices have no efficient in-kernel TPU form (would need one tiny DMA per
    # (row, neighbor)); the (K+1)*F concat of the PyTorch module is realized by
    # prepending the self index to the gather, never materialized separately.
    x_flat = inputs.reshape(M, F).astype(compute_dtype)                   # (M, F)
    self_idx = jnp.arange(M, dtype=neighbors_index.dtype).reshape(B, N, 1)
    idx_all = jnp.concatenate([self_idx, neighbors_index], axis=-1)       # (B, N, K+1)
    feat = jnp.take(x_flat, idx_all.reshape(-1), axis=0).reshape(M, K1F)  # (M, (K+1)F)

    w = weight.astype(compute_dtype)                                      # (K1F, out)
    b2d = bias.astype(jnp.float32).reshape(1, out_features)               # (1, out)

    flops = 2 * M * K1F * out_features
    bytes_accessed = (feat.size * cd_bytes + w.size * cd_bytes
                      + b2d.size * 4 + M * out_features * out_bytes)

    out2d = pl.pallas_call(
        _graphconv_kernel,
        out_shape=jax.ShapeDtypeStruct((M, out_features), out_dtype),
        grid_spec=pltpu.PrefetchScalarGridSpec(
            num_scalar_prefetch=0,
            grid=(grid_m,),
            in_specs=[
                # dominant streamed input; last dim == full dim (legal block).
                # TODO(synk): on v6e, bump to pl.Buffered(3) only if a profile
                # shows exposed DMA on this stream.
                pl.BlockSpec((tile_m, K1F), lambda i: (i, 0)),
                # resident weight & bias: constant index_map, single buffer.
                pl.BlockSpec((K1F, out_features), lambda i: (0, 0),
                             pipeline_mode=pl.Buffered(1)),
                pl.BlockSpec((1, out_features), lambda i: (0, 0),
                             pipeline_mode=pl.Buffered(1)),
            ],
            out_specs=pl.BlockSpec((tile_m, out_features), lambda i: (i, 0)),
        ),
        compiler_params=pltpu.CompilerParams(
            dimension_semantics=("parallel",),
            vmem_limit_bytes=vmem_budget,
        ),
        cost_estimate=pl.CostEstimate(
            flops=flops, transcendentals=0, bytes_accessed=bytes_accessed),
    )(feat, w, b2d)

    return out2d.reshape(B, N, out_features)


def _reference_forward(inputs, neighbors_index, weight, bias):
    """Pure-JAX f32 reference mirroring the PyTorch forward exactly."""
    B, N, F = inputs.shape
    K = neighbors_index.shape[-1]
    x_flat = inputs.reshape(B * N, F)
    nbr = jnp.take(x_flat, neighbors_index.reshape(-1), axis=0).reshape(B, N, K * F)
    feat = jnp.concatenate([inputs, nbr], axis=-1)
    return feat @ weight + bias


if __name__ == "__main__":
    # Small deterministic example consistent with the module:
    #   K + 1 == 6  ->  5 neighbors per node.
    B, N, F = 2, 16, 8
    K = 5
    out_features = 16

    key = jax.random.PRNGKey(0)
    k_in, k_idx, k_w, k_b = jax.random.split(key, 4)

    inputs = jax.random.normal(k_in, (B, N, F), dtype=jnp.float32)
    neighbors_index = jax.random.randint(k_idx, (B, N, K), 0, B * N, dtype=jnp.int32)

    # Deterministic Linear(in_features*6, out_features) params (uniform, torch-like init).
    fan_in = 6 * F
    bound = 1.0 / jnp.sqrt(fan_in)
    weight = jax.random.uniform(k_w, (fan_in, out_features), jnp.float32, -bound, bound)
    bias = jax.random.uniform(k_b, (out_features,), jnp.float32, -bound, bound)

    out = graph_conv_forward(inputs, neighbors_index, weight, bias)
    out = jax.block_until_ready(out)

    ref = _reference_forward(inputs, neighbors_index, weight, bias)
    assert out.shape == (B, N, out_features)
    # bf16 feature/weight streams with f32 accumulation -> modest tolerance.
    assert jnp.allclose(out, ref, atol=2e-2, rtol=2e-2), \
        float(jnp.max(jnp.abs(out - ref)))

    print("KERNEL_OK")
</pallas_src>

<mosaic_0001>
module attributes {stable_mosaic.version = 11 : i64} {
  func.func @_graphconv_kernel(%arg0: i32, %arg1: memref<16x48xbf16, #tpu.memory_space<vmem>>, %arg2: memref<48x16xbf16, #tpu.memory_space<vmem>>, %arg3: memref<1x16xf32, #tpu.memory_space<vmem>>, %arg4: memref<16x16xf32, #tpu.memory_space<vmem>>) attributes {dimension_semantics = [#tpu.dimension_semantics<parallel>], iteration_bounds = array<i64: 2>, scalar_prefetch = 0 : i64, scratch_operands = 0 : i64, tpu.core_type = #tpu.core_type<tc>, window_params = [{transform_indices = @transform_0, window_bounds = array<i64: 16, 48>}, {pipeline_mode = #tpu.pipeline_mode<synchronous>, transform_indices = @transform_1, window_bounds = array<i64: 48, 16>}, {pipeline_mode = #tpu.pipeline_mode<synchronous>, transform_indices = @transform_2, window_bounds = array<i64: 1, 16>}, {transform_indices = @transform_3, window_bounds = array<i64: 16, 16>}]} {
    %c0 = arith.constant 0 : index
    %c0_0 = arith.constant 0 : index
    %0 = vector.load %arg1[%c0, %c0_0] : memref<16x48xbf16, #tpu.memory_space<vmem>>, vector<16x48xbf16>
    %c0_1 = arith.constant 0 : index
    %c0_2 = arith.constant 0 : index
    %1 = vector.load %arg2[%c0_1, %c0_2] : memref<48x16xbf16, #tpu.memory_space<vmem>>, vector<48x16xbf16>
    %cst = arith.constant dense<0.000000e+00> : vector<16x16xf32>
    %2 = tpu.matmul %0, %1, %cst {dimension_numbers = #tpu.dot_dimension_numbers<[1], [0], [0], [1], [0, 0, 1, 1], [], []>} : vector<16x48xbf16>, vector<48x16xbf16>, vector<16x16xf32> -> vector<16x16xf32>
    %c0_3 = arith.constant 0 : index
    %c0_4 = arith.constant 0 : index
    %3 = vector.load %arg3[%c0_3, %c0_4] : memref<1x16xf32, #tpu.memory_space<vmem>>, vector<1x16xf32>
    %4 = vector.broadcast %3 : vector<1x16xf32> to vector<16x16xf32>
    %5 = arith.addf %2, %4 : vector<16x16xf32>
    %c0_5 = arith.constant 0 : index
    %c0_6 = arith.constant 0 : index
    %6 = vector.load %arg4[%c0_5, %c0_6] : memref<16x16xf32, #tpu.memory_space<vmem>>, vector<16x16xf32>
    tpu.vector_store %arg4[%c0_5, %c0_6], %5 {strides = array<i32>} : memref<16x16xf32, #tpu.memory_space<vmem>>, vector<16x16xf32>,
    return
  }
  func.func @transform_0(%arg0: i32) -> (i32, i32) {
    %c0_i32 = arith.constant 0 : i32
    %c0_i32_0 = arith.constant 0 : i32
    return %arg0, %c0_i32 : i32, i32
  }
  func.func @transform_1(%arg0: i32) -> (i32, i32) {
    %c0_i32 = arith.constant 0 : i32
    %c0_i32_0 = arith.constant 0 : i32
    %c0_i32_1 = arith.constant 0 : i32
    return %c0_i32, %c0_i32_0 : i32, i32
  }
  func.func @transform_2(%arg0: i32) -> (i32, i32) {
    %c0_i32 = arith.constant 0 : i32
    %c0_i32_0 = arith.constant 0 : i32
    %c0_i32_1 = arith.constant 0 : i32
    return %c0_i32, %c0_i32_0 : i32, i32
  }
  func.func @transform_3(%arg0: i32) -> (i32, i32) {
    %c0_i32 = arith.constant 0 : i32
    %c0_i32_0 = arith.constant 0 : i32
    return %arg0, %c0_i32 : i32, i32
  }
}

</mosaic_0001>

<llo_original>
// kernel: graph_conv_forward.1
$region0: #{graph_conv_forward.1}
  #allocation0 [shape = 'u32[]', space=smem, size = 0x4, offset = 0x4, fixed_abs, tag = 'smem constant byte address 0x4 - core index']
  #allocation1 [shape = 'u32[72,128]{1,0:T(1,128)}', space=vmem, size = 0x9000, scoped, tag = 'internal scratch']
  %s0 = inlined_call_operand.vmem [shape: bf16[32,48], index: 0, kind: input, shape index: {}]
  %s1 = inlined_call_operand.vmem [shape: bf16[48,16], index: 1, kind: input, shape index: {}]
  %s2 = inlined_call_operand.vmem [shape: f32[1,16], index: 2, kind: input, shape index: {}]
  %s3 = inlined_call_operand.hbm [shape: f32[32,16], index: 3, kind: output, shape index: {}]
  %s4 = sld [smem:[#allocation0]]
  $region45: #{graph_conv_forward.1} parent=0
    _
  %s6 = ssub.s32 1, %s4
  %s7 = scalar_select 0, %s6, %s4
  $region1: #{graph_conv_forward.1} parent=0
    #allocation2 [shape = 'u8[16384]{0}', space=vmem, size = 0x4000, scoped, tag = 'output window, operand 0']
    #allocation3 [shape = 's32[2]{0}', space=sflag, size = 0x8, scoped, tag = 'scoped memory for graph_conv_forward.1']
    %8 = vsyncpa [#allocation3], 0
    %s9 = scalar_lea.sflag [#allocation3], 1
    %10 = vsyncpa %s9, 0
    loop: start=0, step=1, limit=4
    $region2: #{graph_conv_forward.1} parent=1 // loop_pre_header
      _
    $region3: #{graph_conv_forward.1} parent=1 // loop_header
      %s12 = sphi 0, %s16
      %p13 = scmp.ge.s32.totalorder %s12, 4
      %s22 = sphi 0, %s24
      %s25 = sphi 0, %s22
      %s26 = sphi 0, %s25
      %s42 = sphi 0, %s26
      %s46 = sphi 0, %s46
      %s48 = sphi 0, %s46
      %s49 = sphi 0, %s48
      %s63 = sphi 0, %s49
      %s67 = sphi 0, %s67
      %s69 = sphi 0, %s67
      %s70 = sphi 0, %s69
      %s84 = sphi 0, %s70
      %s90 = sphi 0, %s92
      %s93 = sphi 0, %s90
      %s94 = sphi 0, %s93
      %s110 = sphi 0, %s94
    $region4: #{graph_conv_forward.1} parent=1 // loop_header_branch
      %15 = sbr.rel (%p13) target = $region8
    $region5: #{graph_conv_forward.1} parent=1 // loop_body
      %s17 = ssub.s32 %s12, 1
      %s18 = ssub.s32 %s12, 2
      %s19 = sadd.s32 %s12, 1
      %s20 = ssub.s32 %s12, %s19
      %p21 = scmp.eq.s32.totalorder %s20, 0
      %s23 = sadd.s32 %s22, 1
      %s24 = scalar_select %p21, %s22, %s23
      %p27 = pneg %p21
      %p28 = scmp.eq.s32.totalorder %s12, 1
      %p29 = por %p27, %p28
      %p30 = scmp.ne.s32.totalorder %s22, %s25
      %p31 = scmp.eq.s32.totalorder %s12, 0
      %p32 = por %p30, %p31
      %p33 = scmp.ne.s32.totalorder %s22, %s25
      %p34 = scmp.eq.s32.totalorder %s17, 1
      %p35 = por %p33, %p34
      %p36 = scmp.ne.s32.totalorder %s25, %s26
      %p37 = scmp.eq.s32.totalorder %s17, 0
      %p38 = por %p36, %p37
      %p39 = scmp.ne.s32.totalorder %s25, %s26
      %p40 = scmp.eq.s32.totalorder %s18, 1
      %p41 = por %p39, %p40
      %p43 = scmp.ne.s32.totalorder %s26, %s42
      %p44 = scmp.eq.s32.totalorder %s18, 0
      %p45 = por %p43, %p44
      %s47 = sadd.s32 %s46, 1
      %p50 = scmp.eq.s32.totalorder %s12, 1
      %p51 = scmp.ne.s32.totalorder %s46, %s48
      %p52 = scmp.eq.s32.totalorder %s12, 0
      %p53 = por %p51, %p52
      %p54 = scmp.ne.s32.totalorder %s46, %s48
      %p55 = scmp.eq.s32.totalorder %s17, 1
      %p56 = por %p54, %p55
      %p57 = scmp.ne.s32.totalorder %s48, %s49
      %p58 = scmp.eq.s32.totalorder %s17, 0
      %p59 = por %p57, %p58
      %p60 = scmp.ne.s32.totalorder %s48, %s49
      %p61 = scmp.eq.s32.totalorder %s18, 1
      %p62 = por %p60, %p61
      %p64 = scmp.ne.s32.totalorder %s49, %s63
      %p65 = scmp.eq.s32.totalorder %s18, 0
      %p66 = por %p64, %p65
      %s68 = sadd.s32 %s67, 1
      %p71 = scmp.eq.s32.totalorder %s12, 1
      %p72 = scmp.ne.s32.totalorder %s67, %s69
      %p73 = scmp.eq.s32.totalorder %s12, 0
      %p74 = por %p72, %p73
      %p75 = scmp.ne.s32.totalorder %s67, %s69
      %p76 = scmp.eq.s32.totalorder %s17, 1
      %p77 = por %p75, %p76
      %p78 = scmp.ne.s32.totalorder %s69, %s70
      %p79 = scmp.eq.s32.totalorder %s17, 0
      %p80 = por %p78, %p79
      %p81 = scmp.ne.s32.totalorder %s69, %s70
      %p82 = scmp.eq.s32.totalorder %s18, 1
      %p83 = por %p81, %p82
      %p85 = scmp.ne.s32.totalorder %s70, %s84
      %p86 = scmp.eq.s32.totalorder %s18, 0
      %p87 = por %p85, %p86
      %s88 = ssub.s32 %s12, %s19
      %p89 = scmp.eq.s32.totalorder %s88, 0
      %s91 = sadd.s32 %s90, 1
      %s92 = scalar_select %p89, %s90, %s91
      %p95 = pneg %p89
      %p96 = scmp.eq.s32.totalorder %s12, 1
      %p97 = por %p95, %p96
      %p98 = scmp.ne.s32.totalorder %s90, %s93
      %p99 = scmp.eq.s32.totalorder %s12, 0
      %p100 = por %p98, %p99
      %p101 = scmp.ne.s32.totalorder %s90, %s93
      %p102 = scmp.eq.s32.totalorder %s17, 1
      %p103 = por %p101, %p102
      %p104 = scmp.ne.s32.totalorder %s93, %s94
      %p105 = scmp.eq.s32.totalorder %s17, 0
      %p106 = por %p104, %p105
      %p107 = scmp.ne.s32.totalorder %s93, %s94
      %p108 = scmp.eq.s32.totalorder %s18, 1
      %p109 = por %p107, %p108
      %p111 = scmp.ne.s32.totalorder %s94, %s110
      %p112 = scmp.eq.s32.totalorder %s18, 0
      %p113 = por %p111, %p112
      %p114 = scmp.le.s32.totalorder 1, %s12
      %p115 = scmp.lt.s32.totalorder %s12, 3
      %p116 = pnand %p114, %p115
      %p117 = pneg %p116
      // Predicated region
      $region9: #{graph_conv_forward.1} parent=5 // pred_check
        _
      $region10: #{graph_conv_forward.1} parent=5 // pred_check_branch
        %119 = sbr.rel (%p116) target = $region12
      $region11: #{graph_conv_forward.1} parent=5 // pred_region
        %s120 = ssub.s32 %s12, 1
        // Predicated region
        $region13: #{graph_conv_forward.1} parent=11 // pred_check
          %p121 = pneg %p59
        $region14: #{graph_conv_forward.1} parent=11 // pred_check_branch
          %123 = sbr.rel (%p121) target = $region16
        $region15: #{graph_conv_forward.1} parent=11 // pred_region
          _
        $region16: #{graph_conv_forward.1} parent=11 // pred_fallthru
          _
        // Predicated region
        $region17: #{graph_conv_forward.1} parent=11 // pred_check
          %p124 = pneg %p80
        $region18: #{graph_conv_forward.1} parent=11 // pred_check_branch
          %126 = sbr.rel (%p124) target = $region20
        $region19: #{graph_conv_forward.1} parent=11 // pred_region
          _
        $region20: #{graph_conv_forward.1} parent=11 // pred_fallthru
          _
      $region12: #{graph_conv_forward.1} parent=5 // pred_fallthru
        _
      %p127 = scmp.lt.s32.totalorder %s12, 2
      // Predicated region
      $region21: #{graph_conv_forward.1} parent=5 // pred_check
        %p128 = pneg %p127
      $region22: #{graph_conv_forward.1} parent=5 // pred_check_branch
        %130 = sbr.rel (%p128) target = $region24
      $region23: #{graph_conv_forward.1} parent=5 // pred_region
        // Predicated region
        $region25: #{graph_conv_forward.1} parent=23 // pred_check
          %p131 = pneg %p32
        $region26: #{graph_conv_forward.1} parent=23 // pred_check_branch
          %133 = sbr.rel (%p131) target = $region28
        $region27: #{graph_conv_forward.1} parent=23 // pred_region
          %s134 = smul.u32 2, %s12
          %p135 = scmp.lt.s32.totalorder %s134, 3
          %s136 = scalar_select %p135, %s134, 3
          %s137 = smul.addr %s136, 4
          %s138 = scalar_lea.vmem %s0, %s137
          %s139 = smul.u32 2, %s12
        $region28: #{graph_conv_forward.1} parent=23 // pred_fallthru
          _
      $region24: #{graph_conv_forward.1} parent=5 // pred_fallthru
        _
      %p140 = scmp.le.s32.totalorder 1, %s12
      %p141 = scmp.lt.s32.totalorder %s12, 3
      %p142 = pnand %p140, %p141
      %p143 = pneg %p142
      // Predicated region
      $region29: #{graph_conv_forward.1} parent=5 // pred_check
        _
      $region30: #{graph_conv_forward.1} parent=5 // pred_check_branch
        %145 = sbr.rel (%p142) target = $region32
      $region31: #{graph_conv_forward.1} parent=5 // pred_region
        %s146 = ssub.s32 %s12, 1
        %s147 = smul.u32 2, %s17
        %p148 = scmp.lt.s32.totalorder %s147, 3
        %s149 = scalar_select %p148, %s147, 3
        %s150 = smul.addr %s149, 4
        %s151 = scalar_lea.vmem %s0, %s150
        %p152 = pneg %p38
        %p153 = pneg %p35
        %p154 = pneg %p59
        %p155 = pneg %p56
        %p156 = pneg %p80
        %p157 = pneg %p77
        %p158 = pneg %p106
        %p159 = pneg %p103
        %s160 = sand.u32 %s93, 1
        %s161 = scalar_lea.sflag [#allocation3], %s160
        %s162 = sand.u32 %s93, 1
        %s163 = smul.addr %s162, 16
        %s164 = scalar_lea.vmem [#allocation2], %s163
        %s165 = smul.u32 2, %s17
        %p166 = scmp.lt.s32.totalorder %s165, 3
        %s167 = scalar_select %p166, %s165, 3
        %s168 = smul.addr %s167, 4
        %s169 = scalar_lea.vmem %s0, %s168
        %s170 = smul.u32 2, %s17
        %s171 = smul.u32 2, %s17
        %v173 = vld [vmem:[%s169] sm:$0xf]
        %v174 = vld [vmem:[%s169 + $0x4] sm:$0xf]
        %v175 = vld [vmem:[%s1] sm:$0xf]
        %v176 = vld [vmem:[%s1 + $0x4] sm:$0xf]
        %v177 = vld [vmem:[%s1 + $0x8] sm:$0xf]
        %v178 = vld [vmem:[%s1 + $0xc] sm:$0xf]
        %v179 = vld [vmem:[%s1 + $0x10] sm:$0xf]
        %v180 = vld [vmem:[%s1 + $0x14] sm:$0xf]
        %v181 = vld [vmem:[%s2] sm:$0x1]
        %v183 = vperm.slane %v181, 0
        %v187 = vunpack.c.l.b16 %v173
        %v188 = vunpack.c.l.b16 %v174
        %v189 = vpack.c.b16 %v188, %v187
        %v196 = vunpack.c.l.b16 %v175
        %v197 = vunpack.c.l.b16 %v176
        %v198 = vunpack.c.l.b16 %v177
        %v199 = vunpack.c.l.b16 %v178
        %v200 = vunpack.c.l.b16 %v179
        %v201 = vunpack.c.l.b16 %v180
        %v202 = vpack.c.b16 %v197, %v196
        %v203 = vpack.c.b16 %v199, %v198
        %v204 = vpack.c.b16 %v201, %v200
        %vm208 = vcmask 392192
        %v210 = vsel %vm208, %v189, 0
        %212 = vmatpush.bf16.msra.mxu0 0
        %213 = vmatpush.bf16.msra.mxu0 0
        %214 = vmatpush.bf16.msra.mxu0 0
        %215 = vmatpush.bf16.msra.mxu0 0
        %216 = vmatpush.bf16.msra.mxu0 0
        %217 = vmatpush.bf16.msra.mxu0 %v204
        %218 = vmatpush.bf16.msra.mxu0 %v203
        %219 = vmatpush.bf16.msra.mxu0 %v202
        %220 = vmatmul.bf16.gmra.mxu0 %v210
        %v221 = vpop.f32.mrf.mxu0
        %v222 = vadd.f32 %v183, %v221
        %v223 = vpop.f32.mrf.mxu0
        %v224 = vadd.f32 %v183, %v223
        %225 = vdwg.mxu0
        %vm226 = vcmask 130048
        %227 = vst.msk [vmem:[%s164] sm:$0xff] %vm226, %v222
        %228 = vst.msk [vmem:[%s164 + $0x8] sm:$0xff] %vm226, %v224
        %s229 = sand.u32 %s93, 1
        %s230 = scalar_lea.sflag [#allocation3], %s229
        %s231 = sand.u32 %s93, 1
        %s232 = smul.addr %s231, 16
        %s233 = scalar_lea.vmem [#allocation2], %s232
        // Predicated region
        $region33: #{graph_conv_forward.1} parent=31 // pred_check
          %p234 = pneg %p103
        $region34: #{graph_conv_forward.1} parent=31 // pred_check_branch
          %236 = sbr.rel (%p234) target = $region36
        $region35: #{graph_conv_forward.1} parent=31 // pred_region
          %s237 = smul.u32 2, %s17
          %239 = vsyncadd %s230, 0
          %s240 = smul.addr %s237, 8
          %s241 = scalar_lea.hbm %s3, %s240
          %s242 = sshll.u32 %s233, 4
          %s243 = int_to_ptr.vmem [resolvable:$true] %s242
          %s244 = sshll.u32 %s241, 4
          %s245 = int_to_ptr.hbm [resolvable:$true] %s244
          %250 = dma.vmem_to_hbm [thread:$0]  %s243, 256, %s245, %s230, 128, 128, 8
        $region36: #{graph_conv_forward.1} parent=31 // pred_fallthru
          _
      $region32: #{graph_conv_forward.1} parent=5 // pred_fallthru
        _
      %p251 = scmp.le.s32.totalorder 2, %s12
      // Predicated region
      $region37: #{graph_conv_forward.1} parent=5 // pred_check
        %p252 = pneg %p251
      $region38: #{graph_conv_forward.1} parent=5 // pred_check_branch
        %254 = sbr.rel (%p252) target = $region40
      $region39: #{graph_conv_forward.1} parent=5 // pred_region
        %s255 = ssub.s32 %s12, 2
        // Predicated region
        $region41: #{graph_conv_forward.1} parent=39 // pred_check
          %p256 = pneg %p109
        $region42: #{graph_conv_forward.1} parent=39 // pred_check_branch
          %258 = sbr.rel (%p256) target = $region44
        $region43: #{graph_conv_forward.1} parent=39 // pred_region
          %s259 = sand.u32 %s94, 1
          %s260 = scalar_lea.sflag [#allocation3], %s259
          %s261 = sand.u32 %s94, 1
          %s262 = smul.addr %s261, 16
          %s263 = scalar_lea.vmem [#allocation2], %s262
          %265 = dma.done %s260, 256
        $region44: #{graph_conv_forward.1} parent=39 // pred_fallthru
          _
      $region40: #{graph_conv_forward.1} parent=5 // pred_fallthru
        _
    $region6: #{graph_conv_forward.1} parent=1 // loop_footer
      %s16 = sadd.s32 1, %s12
    $region7: #{graph_conv_forward.1} parent=1 // loop_footer_branch
      %11 = sbr.rel target = $region3
    $region8: #{graph_conv_forward.1} parent=1 // loop_exit
      _
    %266 = vsyncpa [#allocation3], 1
    %s267 = scalar_lea.sflag [#allocation3], 1
    %268 = vsyncpa %s267, 1

</llo_original>
